<compile_context>
chip_gen: v7x
topology: tpu7x:2x2x1
jax: 0.10.0
libtpu: 0.0.40
codegen_flags: <defaults>
</compile_context>

<pallas_src>
import functools

import jax
import jax.numpy as jnp
from jax import lax
from jax.experimental import pallas as pl
from jax.experimental.pallas import tpu as pltpu

BN_EPS = 1e-5
LEAKY_SLOPE = 0.2

# Tile preferences (review: larger tn/tk; tm rounded to 16 for bf16 sublane packing).
TM_PREF, TN_PREF, TK_PREF = 512, 512, 1024


def _round_up(x, m):
    return ((x + m - 1) // m) * m


def _default_vmem_limit():
    """Generation-dependent scoped-VMEM limit (review item): large on 128 MiB parts
    (v5e/v6e), conservative on v7x (64 MiB physical)."""
    try:
        info = pltpu.get_tpu_info()
        cap = getattr(info, "vmem_capacity_bytes", None)
        if cap:
            return min(int(cap) * 3 // 4, 100 * 1024 * 1024)
    except Exception:
        pass
    return 48 * 1024 * 1024


VMEM_LIMIT_BYTES = _default_vmem_limit()


# ----------------------------------------------------------------------------
# Fused matmul kernels: out = post_act( pre_act(A) @ W * scale + bias )
#   A : (Mp, Kp) bf16 patches      W : (Kp, Np) bf16
#   scale/bias : (1, Np) f32 per output channel
# ----------------------------------------------------------------------------
def _pre_act(a, pre_act):
    if pre_act == "leaky_relu":
        return jnp.where(a > 0, a, LEAKY_SLOPE * a)
    if pre_act == "relu":
        return jnp.maximum(a, jnp.zeros_like(a))
    return a


def _mm_resident_kernel(a_ref, w_ref, scale_ref, bias_ref, o_ref, *, pre_act, post_act):
    """Whole-K (W-resident) path: grid = (Np//tn, Mp//tm); no K loop, no accumulator."""
    a = _pre_act(a_ref[...], pre_act)
    y = jnp.dot(a, w_ref[...], preferred_element_type=jnp.float32)
    y = y * scale_ref[...] + bias_ref[...]
    if post_act == "tanh":
        y = jnp.tanh(y)
    o_ref[...] = y.astype(o_ref.dtype)


def _mm_ksplit_kernel(a_ref, w_ref, scale_ref, bias_ref, o_ref, acc_ref, *, pre_act, post_act):
    """Fallback for weights too large for VMEM residency: grid = (nj, ni, nk)."""
    k = pl.program_id(2)

    @pl.when(k == 0)
    def _():
        acc_ref[...] = jnp.zeros_like(acc_ref)

    a = _pre_act(a_ref[...], pre_act)
    acc_ref[...] += jnp.dot(a, w_ref[...], preferred_element_type=jnp.float32)

    @pl.when(k == pl.num_programs(2) - 1)
    def _():
        y = acc_ref[...] * scale_ref[...] + bias_ref[...]
        if post_act == "tanh":
            y = jnp.tanh(y)
        o_ref[...] = y.astype(o_ref.dtype)


def _choose_tiles(M, N, K, vmem_limit):
    """Pick (mode, tm, tn, tk) against a per-layer VMEM budget."""
    budget = int(vmem_limit * 0.7)
    Np = _round_up(N, 128)
    Kp = _round_up(K, 128)
    tm = min(_round_up(M, 16), TM_PREF)   # bf16 packs 16 rows/vreg

    def fp(tm_, tn_, tk_, acc):
        a = 2 * tm_ * tk_ * 2            # A, double-buffered bf16
        w = 2 * tk_ * tn_ * 2            # W (counted double-buffered, conservative)
        o = 2 * tm_ * tn_ * 2            # out, double-buffered bf16
        sb = 2 * 2 * tn_ * 4             # scale + bias
        return a + w + o + (tm_ * tn_ * 4 if acc else 0) + sb

    # --- Whole-W-resident path ---
    tm_res = tm
    while fp(tm_res, Np, Kp, acc=False) > budget and tm_res > 16:
        tm_res = max(16, (tm_res // 2) // 16 * 16)
    if fp(tm_res, Np, Kp, acc=False) <= budget:
        tn = Np
        # Megacore (v7x): when there's a single M block, split N so both cores get work.
        if pl.cdiv(M, tm_res) == 1 and Np % 256 == 0:
            tn = Np // 2
        return ("resident", tm_res, tn, Kp)

    # --- K-split fallback (very large weights only) ---
    tn = min(Np, TN_PREF)
    tk = min(Kp, TK_PREF)
    tm_k = tm
    while tk > 256 and fp(tm_k, tn, tk, acc=True) > budget:
        tk = max(128, (tk // 2) // 128 * 128)
    while tm_k > 128 and fp(tm_k, tn, tk, acc=True) > budget:
        tm_k = max(128, (tm_k // 2) // 16 * 16)
    return ("ksplit", tm_k, tn, tk)


def fused_matmul(a, w, scale, bias, *, pre_act="none", post_act="none",
                 out_dtype=jnp.bfloat16):
    M, K = a.shape
    Kw, N = w.shape
    assert K == Kw
    mode, tm, tn, tk = _choose_tiles(M, N, K, VMEM_LIMIT_BYTES)
    Mp, Np, Kp = _round_up(M, tm), _round_up(N, tn), _round_up(K, tk)

    # Zero padding is safe: act(0) = 0, zero rows/cols contribute 0 to the dot.
    a_p = a.astype(jnp.bfloat16)
    if (Mp, Kp) != (M, K):
        a_p = jnp.pad(a_p, ((0, Mp - M), (0, Kp - K)))
    w_p = w.astype(jnp.bfloat16)
    if (Kp, Np) != (K, N):
        w_p = jnp.pad(w_p, ((0, Kp - K), (0, Np - N)))
    scale_p = scale.astype(jnp.float32)
    bias_p = bias.astype(jnp.float32)
    if Np != N:
        scale_p = jnp.pad(scale_p, ((0, 0), (0, Np - N)))
        bias_p = jnp.pad(bias_p, ((0, 0), (0, Np - N)))

    nj, ni, nk = Np // tn, Mp // tm, Kp // tk
    cost = pl.CostEstimate(
        flops=2 * Mp * Np * Kp,
        transcendentals=(Mp * Np if post_act == "tanh" else 0),
        bytes_accessed=2 * (Mp * Kp * nj + Kp * Np * (1 if mode == "resident" else ni)
                            + Mp * Np),
    )

    if mode == "resident":
        kernel = functools.partial(_mm_resident_kernel, pre_act=pre_act, post_act=post_act)
        out = pl.pallas_call(
            kernel,
            out_shape=jax.ShapeDtypeStruct((Mp, Np), out_dtype),
            grid_spec=pltpu.PrefetchScalarGridSpec(
                num_scalar_prefetch=0,
                grid=(nj, ni),
                in_specs=[
                    pl.BlockSpec((tm, Kp), lambda j, i: (i, 0)),
                    pl.BlockSpec((Kp, tn), lambda j, i: (0, j)),   # constant over i -> W DMAed once
                    pl.BlockSpec((1, tn), lambda j, i: (0, j)),
                    pl.BlockSpec((1, tn), lambda j, i: (0, j)),
                ],
                out_specs=pl.BlockSpec((tm, tn), lambda j, i: (i, j)),
            ),
            compiler_params=pltpu.CompilerParams(
                dimension_semantics=("parallel", "parallel"),
                vmem_limit_bytes=VMEM_LIMIT_BYTES,
            ),
            cost_estimate=cost,
        )(a_p, w_p, scale_p, bias_p)
    else:
        kernel = functools.partial(_mm_ksplit_kernel, pre_act=pre_act, post_act=post_act)
        out = pl.pallas_call(
            kernel,
            out_shape=jax.ShapeDtypeStruct((Mp, Np), out_dtype),
            grid_spec=pltpu.PrefetchScalarGridSpec(
                num_scalar_prefetch=0,
                grid=(nj, ni, nk),
                in_specs=[
                    pl.BlockSpec((tm, tk), lambda j, i, k: (i, k)),
                    pl.BlockSpec((tk, tn), lambda j, i, k: (k, j)),
                    pl.BlockSpec((1, tn), lambda j, i, k: (0, j)),
                    pl.BlockSpec((1, tn), lambda j, i, k: (0, j)),
                ],
                out_specs=pl.BlockSpec((tm, tn), lambda j, i, k: (i, j)),
                scratch_shapes=[pltpu.VMEM((tm, tn), jnp.float32)],
            ),
            compiler_params=pltpu.CompilerParams(
                dimension_semantics=("parallel", "parallel", "arbitrary"),
                vmem_limit_bytes=VMEM_LIMIT_BYTES,
            ),
            cost_estimate=cost,
        )(a_p, w_p, scale_p, bias_p)

    if (Mp, Np) != (M, N):
        out = out[:M, :N]
    return out


# ----------------------------------------------------------------------------
# Layout glue (no heavy compute): space-to-depth, k=2 im2col, pixel shuffle,
# and one-time weight re-layouts.
# ----------------------------------------------------------------------------
def _im2col_k2(s):
    """k=2, s=1, valid im2col. s: (N,Hs,Ws,C) -> (N*(Hs-1)*(Ws-1), 4*C); tap order (dy,dx)."""
    N, Hs, Ws, C = s.shape
    Ho, Wo = Hs - 1, Ws - 1
    cols = [s[:, dy:dy + Ho, dx:dx + Wo, :] for dy in range(2) for dx in range(2)]
    return jnp.concatenate(cols, axis=-1).reshape(N * Ho * Wo, 4 * C)


def _down_weight_matrix(w):
    """Conv2d weight (Cout, Cin, 4, 4) -> (16*Cin, Cout), rows ordered (dy,dx,py,px,c),
    matching space-to-depth + k=2 im2col (torch ky = 2*dy+py, kx = 2*dx+px)."""
    cout, C = w.shape[:2]
    wr = w.reshape(cout, C, 2, 2, 2, 2)                       # (co, c, dy, py, dx, px)
    return jnp.transpose(wr, (2, 4, 3, 5, 1, 0)).reshape(16 * C, cout)


def _up_weight_matrix(wt):
    """ConvTranspose2d weight (Cin, Cout, 4, 4) -> (4*Cin, 4*Cout) sub-pixel matrix:
    wm[(dy,dx,c),(py,px,co)] = wt[c, co, py+2-2dy, px+2-2dx]."""
    Cin, cout = wt.shape[:2]
    wr = wt.reshape(Cin, cout, 2, 2, 2, 2)                    # (c, co, ay, py, ax, px), k=2a+p
    wrf = wr[:, :, ::-1, :, ::-1, :]                          # a -> d = 1 - a
    return jnp.transpose(wrf, (2, 4, 0, 3, 5, 1)).reshape(4 * Cin, 4 * cout)


def conv_down(x, wm, scale, bias, pre_act):
    """pre_act + Conv2d(k=4,s=2,p=1,bias=False) + folded BN. x: (N,H,W,Cin) bf16."""
    N, H, W, C = x.shape
    cout = wm.shape[1]
    Ho, Wo = H // 2, W // 2
    xp = jnp.pad(x, ((0, 0), (1, 1), (1, 1), (0, 0)))
    # space-to-depth (1x data): s[n,i,j,(py,px,c)] = xp[n, 2i+py, 2j+px, c]
    s = xp.reshape(N, Ho + 1, 2, Wo + 1, 2, C)
    s = jnp.transpose(s, (0, 1, 3, 2, 4, 5)).reshape(N, Ho + 1, Wo + 1, 4 * C)
    # TODO(synk): gather the 4 k=2 taps inside the kernel (shifted BlockSpecs / emit_pipeline)
    # instead of materializing the 4x im2col patches in HBM.
    patches = _im2col_k2(s)                                   # (N*Ho*Wo, 16*C)
    y = fused_matmul(patches, wm, scale, bias, pre_act=pre_act, post_act="none")
    return y.reshape(N, Ho, Wo, cout)


def conv_up(x, wm4, scale4, bias4, post_act):
    """ReLU + ConvTranspose2d(k=4,s=2,p=1) (+ folded BN / bias / tanh) via a 4-phase
    sub-pixel decomposition; pixel shuffle is one transpose + reshape + static slice.
    x: (N,H,W,Cin) bf16; wm4: (4*Cin, 4*Cout)."""
    N, H, W, Cin = x.shape
    cout = wm4.shape[1] // 4
    xp = jnp.pad(x, ((0, 0), (1, 1), (1, 1), (0, 0)))
    patches = _im2col_k2(xp)                                  # (N*(H+1)*(W+1), 4*Cin)
    y = fused_matmul(patches, wm4, scale4, bias4, pre_act="relu", post_act=post_act)
    big = y.reshape(N, H + 1, W + 1, 2, 2, cout)              # (n, r, c, py, px, co)
    full = jnp.transpose(big, (0, 1, 3, 2, 4, 5)).reshape(N, 2 * (H + 1), 2 * (W + 1), cout)
    return full[:, 1:2 * H + 1, 1:2 * W + 1, :]


# ----------------------------------------------------------------------------
# Parameters mirroring UnetBlock / Unet.__init__ (eval-mode, BN folded, weights in
# matmul layout / bf16 precomputed once).
# ----------------------------------------------------------------------------
def _bn_fold(gamma, beta, running_mean, running_var):
    scale = gamma / jnp.sqrt(running_var + BN_EPS)
    bias = beta - running_mean * scale
    return scale.reshape(1, -1), bias.reshape(1, -1)


def make_block_params(key, nf, ni, input_c=None, sub=None, innermost=False, outermost=False):
    if input_c is None:
        input_c = nf
    k = jax.random.split(key, 4)
    p = {"innermost": innermost, "outermost": outermost, "sub": sub}
    # downconv = Conv2d(input_c, ni, 4, 2, 1, bias=False); weight ~ N(0, 0.02)
    down_w = 0.02 * jax.random.normal(k[0], (ni, input_c, 4, 4), jnp.float32)
    p["down_wm"] = _down_weight_matrix(down_w).astype(jnp.bfloat16)
    if innermost or outermost:                 # no BN after downconv in these blocks
        p["down_scale"] = jnp.ones((1, ni), jnp.float32)
        p["down_bias"] = jnp.zeros((1, ni), jnp.float32)
    else:
        gamma = 1.0 + 0.02 * jax.random.normal(k[1], (ni,), jnp.float32)
        p["down_scale"], p["down_bias"] = _bn_fold(
            gamma, jnp.zeros((ni,)), jnp.zeros((ni,)), jnp.ones((ni,)))
    up_in = ni if innermost else 2 * ni
    # upconv = ConvTranspose2d(up_in, nf, 4, 2, 1); weight ~ N(0, 0.02)
    up_w = 0.02 * jax.random.normal(k[2], (up_in, nf, 4, 4), jnp.float32)
    p["up_wm"] = _up_weight_matrix(up_w).astype(jnp.bfloat16)
    if outermost:                              # bias=True (init 0), Tanh, no BN
        scale = jnp.ones((1, nf), jnp.float32)
        bias = jnp.zeros((1, nf), jnp.float32)
    else:                                      # bias=False, BatchNorm2d(nf)
        gamma = 1.0 + 0.02 * jax.random.normal(k[3], (nf,), jnp.float32)
        scale, bias = _bn_fold(gamma, jnp.zeros((nf,)), jnp.zeros((nf,)), jnp.ones((nf,)))
    p["up_scale4"] = jnp.tile(scale, (1, 4))   # matches (py, px, co) column order
    p["up_bias4"] = jnp.tile(bias, (1, 4))
    return p


def build_unet_params(key, input_c=1, output_c=2, n_down=8, num_filters=64):
    keys = iter(jax.random.split(key, n_down))
    block = make_block_params(next(keys), num_filters * 8, num_filters * 8, innermost=True)
    for _ in range(n_down - 5):
        # dropout=True in torch; Dropout(0.5) is identity in eval mode
        block = make_block_params(next(keys), num_filters * 8, num_filters * 8, sub=block)
    out_filters = num_filters * 8
    for _ in range(3):
        block = make_block_params(next(keys), out_filters // 2, out_filters, sub=block)
        out_filters //= 2
    return make_block_params(next(keys), output_c, out_filters, input_c=input_c,
                             sub=block, outermost=True)


# ----------------------------------------------------------------------------
# Forward pass (mirrors UnetBlock.forward / Unet.forward)
# ----------------------------------------------------------------------------
def unet_block_forward(p, x):
    pre = "none" if p["outermost"] else "leaky_relu"
    d = conv_down(x, p["down_wm"], p["down_scale"], p["down_bias"], pre_act=pre)
    mid = d if p["innermost"] else unet_block_forward(p["sub"], d)
    if p["outermost"]:
        return conv_up(mid, p["up_wm"], p["up_scale4"], p["up_bias4"], post_act="tanh")
    u = conv_up(mid, p["up_wm"], p["up_scale4"], p["up_bias4"], post_act="none")
    # TODO(synk): feed x and u as two A operands (split-K) into the next down conv's fused
    # matmul instead of materializing the channel concat in HBM.
    return jnp.concatenate([x, u], axis=-1)   # torch.cat([x, model(x)], dim=1) in NHWC


def unet_forward(params, x_nchw):
    x = jnp.transpose(x_nchw, (0, 2, 3, 1)).astype(jnp.bfloat16)  # NCHW -> NHWC, bf16
    y = unet_block_forward(params, x)
    return jnp.transpose(y, (0, 3, 1, 2)).astype(jnp.float32)     # NHWC -> NCHW


if __name__ == "__main__":
    key = jax.random.PRNGKey(0)
    kp, kx, kw, ku = jax.random.split(key, 4)

    # Small but structurally faithful Unet: n_down=5, num_filters=8; spatial % 2**n_down == 0.
    N_DOWN, NUM_FILTERS, SIZE_, BATCH = 5, 8, 32, 2
    params = build_unet_params(kp, input_c=1, output_c=2, n_down=N_DOWN, num_filters=NUM_FILTERS)

    x = jax.random.normal(kx, (BATCH, 1, SIZE_, SIZE_), jnp.float32)
    x_nhwc = jnp.transpose(x, (0, 2, 3, 1))
    x_bf = x_nhwc.astype(jnp.bfloat16)

    # --- sanity: down conv (space-to-depth + fused matmul) vs lax reference ---
    w_chk = 0.02 * jax.random.normal(kw, (8, 1, 4, 4), jnp.float32)
    ref = lax.conv_general_dilated(
        x_bf.astype(jnp.float32),
        jnp.transpose(w_chk, (2, 3, 1, 0)).astype(jnp.bfloat16).astype(jnp.float32),
        window_strides=(2, 2), padding=((1, 1), (1, 1)),
        dimension_numbers=("NHWC", "HWIO", "NHWC"))
    got = conv_down(x_bf, _down_weight_matrix(w_chk).astype(jnp.bfloat16),
                    jnp.ones((1, 8), jnp.float32), jnp.zeros((1, 8), jnp.float32),
                    pre_act="none").astype(jnp.float32)
    assert jnp.allclose(ref, got, atol=5e-3, rtol=5e-2), float(jnp.max(jnp.abs(ref - got)))

    # --- sanity: up conv (sub-pixel transposed conv + pixel shuffle) vs lax reference ---
    cin_u, cout_u = 8, 8
    xu = jax.random.normal(ku, (2, 4, 4, cin_u), jnp.float32).astype(jnp.bfloat16)
    wt = 0.02 * jax.random.normal(kw, (cin_u, cout_u, 4, 4), jnp.float32)
    wflip = jnp.transpose(wt[:, :, ::-1, ::-1], (2, 3, 0, 1))  # HWIO
    ref_u = lax.conv_general_dilated(
        jax.nn.relu(xu.astype(jnp.float32)),
        wflip.astype(jnp.bfloat16).astype(jnp.float32),
        window_strides=(1, 1), padding=((2, 2), (2, 2)), lhs_dilation=(2, 2),
        dimension_numbers=("NHWC", "HWIO", "NHWC"))
    got_u = conv_up(xu, _up_weight_matrix(wt).astype(jnp.bfloat16),
                    jnp.ones((1, 4 * cout_u), jnp.float32),
                    jnp.zeros((1, 4 * cout_u), jnp.float32),
                    post_act="none").astype(jnp.float32)
    assert jnp.allclose(ref_u, got_u, atol=5e-3, rtol=5e-2), float(jnp.max(jnp.abs(ref_u - got_u)))

    # --- full forward ---
    unet_apply = jax.jit(functools.partial(unet_forward, params))
    y = jax.block_until_ready(unet_apply(x))
    assert y.shape == (BATCH, 2, SIZE_, SIZE_), y.shape
    assert bool(jnp.all(jnp.isfinite(y)))
    assert bool(jnp.all(jnp.abs(y) <= 1.0 + 1e-3))   # final Tanh

    print("KERNEL_OK")
</pallas_src>

<mosaic_0001>
module attributes {stable_mosaic.version = 11 : i64} {
  func.func @_mm_resident_kernel(%arg0: i32, %arg1: i32, %arg2: memref<512x128xbf16, #tpu.memory_space<vmem>>, %arg3: memref<128x128xbf16, #tpu.memory_space<vmem>>, %arg4: memref<1x128xf32, #tpu.memory_space<vmem>>, %arg5: memref<1x128xf32, #tpu.memory_space<vmem>>, %arg6: memref<512x128xbf16, #tpu.memory_space<vmem>>) attributes {dimension_semantics = [#tpu.dimension_semantics<parallel>, #tpu.dimension_semantics<parallel>], iteration_bounds = array<i64: 1, 1>, scalar_prefetch = 0 : i64, scratch_operands = 0 : i64, tpu.core_type = #tpu.core_type<tc>, window_params = [{transform_indices = @transform_0, window_bounds = array<i64: 512, 128>}, {transform_indices = @transform_1, window_bounds = array<i64: 128, 128>}, {transform_indices = @transform_2, window_bounds = array<i64: 1, 128>}, {transform_indices = @transform_3, window_bounds = array<i64: 1, 128>}, {transform_indices = @transform_4, window_bounds = array<i64: 512, 128>}]} {
    %c0 = arith.constant 0 : index
    %c0_0 = arith.constant 0 : index
    %0 = vector.load %arg2[%c0, %c0_0] : memref<512x128xbf16, #tpu.memory_space<vmem>>, vector<512x128xbf16>
    %c0_1 = arith.constant 0 : index
    %c0_2 = arith.constant 0 : index
    %1 = vector.load %arg3[%c0_1, %c0_2] : memref<128x128xbf16, #tpu.memory_space<vmem>>, vector<128x128xbf16>
    %cst = arith.constant dense<0.000000e+00> : vector<512x128xf32>
    %2 = tpu.matmul %0, %1, %cst {dimension_numbers = #tpu.dot_dimension_numbers<[1], [0], [0], [1], [0, 0, 1, 1], [], []>} : vector<512x128xbf16>, vector<128x128xbf16>, vector<512x128xf32> -> vector<512x128xf32>
    %c0_3 = arith.constant 0 : index
    %c0_4 = arith.constant 0 : index
    %3 = vector.load %arg4[%c0_3, %c0_4] : memref<1x128xf32, #tpu.memory_space<vmem>>, vector<1x128xf32>
    %4 = vector.broadcast %3 : vector<1x128xf32> to vector<512x128xf32>
    %5 = arith.mulf %2, %4 : vector<512x128xf32>
    %c0_5 = arith.constant 0 : index
    %c0_6 = arith.constant 0 : index
    %6 = vector.load %arg5[%c0_5, %c0_6] : memref<1x128xf32, #tpu.memory_space<vmem>>, vector<1x128xf32>
    %7 = vector.broadcast %6 : vector<1x128xf32> to vector<512x128xf32>
    %8 = arith.addf %5, %7 : vector<512x128xf32>
    %9 = arith.truncf %8 : vector<512x128xf32> to vector<512x128xbf16>
    %c0_7 = arith.constant 0 : index
    %c0_8 = arith.constant 0 : index
    %10 = vector.load %arg6[%c0_7, %c0_8] : memref<512x128xbf16, #tpu.memory_space<vmem>>, vector<512x128xbf16>
    tpu.vector_store %arg6[%c0_7, %c0_8], %9 {strides = array<i32>} : memref<512x128xbf16, #tpu.memory_space<vmem>>, vector<512x128xbf16>,
    return
  }
  func.func @transform_0(%arg0: i32, %arg1: i32) -> (i32, i32) {
    %c0_i32 = arith.constant 0 : i32
    %c0_i32_0 = arith.constant 0 : i32
    return %arg1, %c0_i32 : i32, i32
  }
  func.func @transform_1(%arg0: i32, %arg1: i32) -> (i32, i32) {
    %c0_i32 = arith.constant 0 : i32
    %c0_i32_0 = arith.constant 0 : i32
    return %c0_i32, %arg0 : i32, i32
  }
  func.func @transform_2(%arg0: i32, %arg1: i32) -> (i32, i32) {
    %c0_i32 = arith.constant 0 : i32
    %c0_i32_0 = arith.constant 0 : i32
    return %c0_i32, %arg0 : i32, i32
  }
  func.func @transform_3(%arg0: i32, %arg1: i32) -> (i32, i32) {
    %c0_i32 = arith.constant 0 : i32
    %c0_i32_0 = arith.constant 0 : i32
    return %c0_i32, %arg0 : i32, i32
  }
  func.func @transform_4(%arg0: i32, %arg1: i32) -> (i32, i32) {
    %c0_i32 = arith.constant 0 : i32
    return %arg1, %arg0 : i32, i32
  }
}

</mosaic_0001>

<llo_original>
// kernel: tpu_custom_call.1
$region0: #{tpu_custom_call.1}
  #allocation0 [shape = 'u32[]', space=smem, size = 0x4, offset = 0x4, fixed_abs, tag = 'smem constant byte address 0x4 - core index']
  #allocation1 [shape = 'u32[144,128]{1,0:T(1,128)}', space=vmem, size = 0x12000, scoped, tag = 'internal scratch']
  %s0 = inlined_call_operand.hbm [shape: bf16[512,128], index: 0, kind: input, shape index: {}]
  %s1 = inlined_call_operand.hbm [shape: bf16[128,128], index: 1, kind: input, shape index: {}]
  %s2 = inlined_call_operand.vmem [shape: f32[1,128], index: 2, kind: input, shape index: {}]
  %s3 = inlined_call_operand.vmem [shape: f32[1,128], index: 3, kind: input, shape index: {}]
  %s4 = inlined_call_operand.hbm [shape: bf16[512,128], index: 4, kind: output, shape index: {}]
  %s5 = sld [smem:[#allocation0]]
  $region34: #{tpu_custom_call.1} parent=0
    _
  %s7 = ssub.s32 1, %s5
  %s8 = scalar_select 0, %s7, %s5
  $region1: #{tpu_custom_call.1} parent=0
    #allocation2 [shape = 'u8[131072]{0}', space=vmem, size = 0x20000, scoped, tag = 'input window, operand 0, single buffered']
    #allocation3 [shape = 's32[1]{0}', space=sflag, size = 0x4, scoped, tag = 'scoped memory for tpu_custom_call.1']
    #allocation4 [shape = 's32[1]{0}', space=sflag, size = 0x4, scoped, tag = 'scoped memory for tpu_custom_call.1']
    #allocation5 [shape = 'u8[32768]{0}', space=vmem, size = 0x8000, scoped, tag = 'input window, operand 1, single buffered']
    #allocation6 [shape = 's32[1]{0}', space=sflag, size = 0x4, scoped, tag = 'scoped memory for tpu_custom_call.1']
    #allocation7 [shape = 'u8[131072]{0}', space=vmem, size = 0x20000, scoped, tag = 'output window, operand 0, single buffered']
    %9 = vsyncpa [#allocation3], 0
    %10 = vsyncpa [#allocation6], 0
    %11 = vsyncpa [#allocation4], 0
    // Predicated region
    $region2: #{tpu_custom_call.1} parent=1 // pred_check
      _
    $region3: #{tpu_custom_call.1} parent=1 // pred_check_branch
      %13 = sbr.rel (0) target = $region5
    $region4: #{tpu_custom_call.1} parent=1 // pred_region
      %s15 = ssub.s32 4096, 4096
      %16 = vsyncadd [#allocation3], %s15
      %s17 = sshll.u32 [#allocation2], 4
      %s18 = int_to_ptr.vmem [resolvable:$true] %s17
      %23 = dma.hbm_to_vmem [thread:$0]  %s0, 4096, %s18, [#allocation3], 64, 64, 4
    $region5: #{tpu_custom_call.1} parent=1 // pred_fallthru
      _
    // Predicated region
    $region6: #{tpu_custom_call.1} parent=1 // pred_check
      _
    $region7: #{tpu_custom_call.1} parent=1 // pred_check_branch
      %25 = sbr.rel (0) target = $region9
    $region8: #{tpu_custom_call.1} parent=1 // pred_region
      %s27 = ssub.s32 1024, 1024
      %28 = vsyncadd [#allocation6], %s27
      %s29 = sshll.u32 [#allocation5], 4
      %s30 = int_to_ptr.vmem [resolvable:$true] %s29
      %35 = dma.hbm_to_vmem [thread:$0]  %s1, 1024, %s30, [#allocation6], 64, 64, 4
    $region9: #{tpu_custom_call.1} parent=1 // pred_fallthru
      _
    // Predicated region
    $region10: #{tpu_custom_call.1} parent=1 // pred_check
      _
    $region11: #{tpu_custom_call.1} parent=1 // pred_check_branch
      %37 = sbr.rel (0) target = $region13
    $region12: #{tpu_custom_call.1} parent=1 // pred_region
      _
    $region13: #{tpu_custom_call.1} parent=1 // pred_fallthru
      _
    // Predicated region
    $region14: #{tpu_custom_call.1} parent=1 // pred_check
      _
    $region15: #{tpu_custom_call.1} parent=1 // pred_check_branch
      %39 = sbr.rel (0) target = $region17
    $region16: #{tpu_custom_call.1} parent=1 // pred_region
      _
    $region17: #{tpu_custom_call.1} parent=1 // pred_fallthru
      _
    // Predicated region
    $region18: #{tpu_custom_call.1} parent=1 // pred_check
      _
    $region19: #{tpu_custom_call.1} parent=1 // pred_check_branch
      %41 = sbr.rel (0) target = $region21
    $region20: #{tpu_custom_call.1} parent=1 // pred_region
      %42 = dma.done [#allocation3], 4096
    $region21: #{tpu_custom_call.1} parent=1 // pred_fallthru
      _
    // Predicated region
    $region22: #{tpu_custom_call.1} parent=1 // pred_check
      _
    $region23: #{tpu_custom_call.1} parent=1 // pred_check_branch
      %44 = sbr.rel (0) target = $region25
    $region24: #{tpu_custom_call.1} parent=1 // pred_region
      %45 = dma.done [#allocation6], 1024
    $region25: #{tpu_custom_call.1} parent=1 // pred_fallthru
      _
    %v47 = vld [vmem:[#allocation2] sm:$0xf]
    %v48 = vld [vmem:[#allocation2 + $0x4] sm:$0xf]
    %v49 = vld [vmem:[#allocation2 + $0x8] sm:$0xf]
    %v50 = vld [vmem:[#allocation2 + $0xc] sm:$0xf]
    %v51 = vld [vmem:[#allocation2 + $0x10] sm:$0xf]
    %v52 = vld [vmem:[#allocation2 + $0x14] sm:$0xf]
    %v53 = vld [vmem:[#allocation2 + $0x18] sm:$0xf]
    %v54 = vld [vmem:[#allocation2 + $0x1c] sm:$0xf]
    %v55 = vld [vmem:[#allocation2 + $0x20] sm:$0xf]
    %v56 = vld [vmem:[#allocation2 + $0x24] sm:$0xf]
    %v57 = vld [vmem:[#allocation2 + $0x28] sm:$0xf]
    %v58 = vld [vmem:[#allocation2 + $0x2c] sm:$0xf]
    %v59 = vld [vmem:[#allocation2 + $0x30] sm:$0xf]
    %v60 = vld [vmem:[#allocation2 + $0x34] sm:$0xf]
    %v61 = vld [vmem:[#allocation2 + $0x38] sm:$0xf]
    %v62 = vld [vmem:[#allocation2 + $0x3c] sm:$0xf]
    %v63 = vld [vmem:[#allocation2 + $0x40] sm:$0xf]
    %v64 = vld [vmem:[#allocation2 + $0x44] sm:$0xf]
    %v65 = vld [vmem:[#allocation2 + $0x48] sm:$0xf]
    %v66 = vld [vmem:[#allocation2 + $0x4c] sm:$0xf]
    %v67 = vld [vmem:[#allocation2 + $0x50] sm:$0xf]
    %v68 = vld [vmem:[#allocation2 + $0x54] sm:$0xf]
    %v69 = vld [vmem:[#allocation2 + $0x58] sm:$0xf]
    %v70 = vld [vmem:[#allocation2 + $0x5c] sm:$0xf]
    %v71 = vld [vmem:[#allocation2 + $0x60] sm:$0xf]
    %v72 = vld [vmem:[#allocation2 + $0x64] sm:$0xf]
    %v73 = vld [vmem:[#allocation2 + $0x68] sm:$0xf]
    %v74 = vld [vmem:[#allocation2 + $0x6c] sm:$0xf]
    %v75 = vld [vmem:[#allocation2 + $0x70] sm:$0xf]
    %v76 = vld [vmem:[#allocation2 + $0x74] sm:$0xf]
    %v77 = vld [vmem:[#allocation2 + $0x78] sm:$0xf]
    %v78 = vld [vmem:[#allocation2 + $0x7c] sm:$0xf]
    %v79 = vld [vmem:[#allocation2 + $0x80] sm:$0xf]
    %v80 = vld [vmem:[#allocation2 + $0x84] sm:$0xf]
    %v81 = vld [vmem:[#allocation2 + $0x88] sm:$0xf]
    %v82 = vld [vmem:[#allocation2 + $0x8c] sm:$0xf]
    %v83 = vld [vmem:[#allocation2 + $0x90] sm:$0xf]
    %v84 = vld [vmem:[#allocation2 + $0x94] sm:$0xf]
    %v85 = vld [vmem:[#allocation2 + $0x98] sm:$0xf]
    %v86 = vld [vmem:[#allocation2 + $0x9c] sm:$0xf]
    %v87 = vld [vmem:[#allocation2 + $0xa0] sm:$0xf]
    %v88 = vld [vmem:[#allocation2 + $0xa4] sm:$0xf]
    %v89 = vld [vmem:[#allocation2 + $0xa8] sm:$0xf]
    %v90 = vld [vmem:[#allocation2 + $0xac] sm:$0xf]
    %v91 = vld [vmem:[#allocation2 + $0xb0] sm:$0xf]
    %v92 = vld [vmem:[#allocation2 + $0xb4] sm:$0xf]
    %v93 = vld [vmem:[#allocation2 + $0xb8] sm:$0xf]
    %v94 = vld [vmem:[#allocation2 + $0xbc] sm:$0xf]
    %v95 = vld [vmem:[#allocation2 + $0xc0] sm:$0xf]
    %v96 = vld [vmem:[#allocation2 + $0xc4] sm:$0xf]
    %v97 = vld [vmem:[#allocation2 + $0xc8] sm:$0xf]
    %v98 = vld [vmem:[#allocation2 + $0xcc] sm:$0xf]
    %v99 = vld [vmem:[#allocation2 + $0xd0] sm:$0xf]
    %v100 = vld [vmem:[#allocation2 + $0xd4] sm:$0xf]
    %v101 = vld [vmem:[#allocation2 + $0xd8] sm:$0xf]
    %v102 = vld [vmem:[#allocation2 + $0xdc] sm:$0xf]
    %v103 = vld [vmem:[#allocation2 + $0xe0] sm:$0xf]
    %v104 = vld [vmem:[#allocation2 + $0xe4] sm:$0xf]
    %v105 = vld [vmem:[#allocation2 + $0xe8] sm:$0xf]
    %v106 = vld [vmem:[#allocation2 + $0xec] sm:$0xf]
    %v107 = vld [vmem:[#allocation2 + $0xf0] sm:$0xf]
    %v108 = vld [vmem:[#allocation2 + $0xf4] sm:$0xf]
    %v109 = vld [vmem:[#allocation2 + $0xf8] sm:$0xf]
    %v110 = vld [vmem:[#allocation2 + $0xfc] sm:$0xf]
    %v111 = vld [vmem:[#allocation5] sm:$0xf]
    %v112 = vld [vmem:[#allocation5 + $0x4] sm:$0xf]
    %v113 = vld [vmem:[#allocation5 + $0x8] sm:$0xf]
    %v114 = vld [vmem:[#allocation5 + $0xc] sm:$0xf]
    %v115 = vld [vmem:[#allocation5 + $0x10] sm:$0xf]
    %v116 = vld [vmem:[#allocation5 + $0x14] sm:$0xf]
    %v117 = vld [vmem:[#allocation5 + $0x18] sm:$0xf]
    %v118 = vld [vmem:[#allocation5 + $0x1c] sm:$0xf]
    %v119 = vld [vmem:[#allocation5 + $0x20] sm:$0xf]
    %v120 = vld [vmem:[#allocation5 + $0x24] sm:$0xf]
    %v121 = vld [vmem:[#allocation5 + $0x28] sm:$0xf]
    %v122 = vld [vmem:[#allocation5 + $0x2c] sm:$0xf]
    %v123 = vld [vmem:[#allocation5 + $0x30] sm:$0xf]
    %v124 = vld [vmem:[#allocation5 + $0x34] sm:$0xf]
    %v125 = vld [vmem:[#allocation5 + $0x38] sm:$0xf]
    %v126 = vld [vmem:[#allocation5 + $0x3c] sm:$0xf]
    %v191 = vunpack.c.l.b16 %v47
    %v192 = vunpack.c.l.b16 %v48
    %v193 = vunpack.c.l.b16 %v49
    %v194 = vunpack.c.l.b16 %v50
    %v195 = vunpack.c.l.b16 %v51
    %v196 = vunpack.c.l.b16 %v52
    %v197 = vunpack.c.l.b16 %v53
    %v198 = vunpack.c.l.b16 %v54
    %v199 = vunpack.c.l.b16 %v55
    %v200 = vunpack.c.l.b16 %v56
    %v201 = vunpack.c.l.b16 %v57
    %v202 = vunpack.c.l.b16 %v58
    %v203 = vunpack.c.l.b16 %v59
    %v204 = vunpack.c.l.b16 %v60
    %v205 = vunpack.c.l.b16 %v61
    %v206 = vunpack.c.l.b16 %v62
    %v207 = vunpack.c.l.b16 %v63
    %v208 = vunpack.c.l.b16 %v64
    %v209 = vunpack.c.l.b16 %v65
    %v210 = vunpack.c.l.b16 %v66
    %v211 = vunpack.c.l.b16 %v67
    %v212 = vunpack.c.l.b16 %v68
    %v213 = vunpack.c.l.b16 %v69
    %v214 = vunpack.c.l.b16 %v70
    %v215 = vunpack.c.l.b16 %v71
    %v216 = vunpack.c.l.b16 %v72
    %v217 = vunpack.c.l.b16 %v73
    %v218 = vunpack.c.l.b16 %v74
    %v219 = vunpack.c.l.b16 %v75
    %v220 = vunpack.c.l.b16 %v76
    %v221 = vunpack.c.l.b16 %v77
    %v222 = vunpack.c.l.b16 %v78
    %v223 = vunpack.c.l.b16 %v79
    %v224 = vunpack.c.l.b16 %v80
    %v225 = vunpack.c.l.b16 %v81
    %v226 = vunpack.c.l.b16 %v82
    %v227 = vunpack.c.l.b16 %v83
    %v228 = vunpack.c.l.b16 %v84
    %v229 = vunpack.c.l.b16 %v85
    %v230 = vunpack.c.l.b16 %v86
    %v231 = vunpack.c.l.b16 %v87
    %v232 = vunpack.c.l.b16 %v88
    %v233 = vunpack.c.l.b16 %v89
    %v234 = vunpack.c.l.b16 %v90
    %v235 = vunpack.c.l.b16 %v91
    %v236 = vunpack.c.l.b16 %v92
    %v237 = vunpack.c.l.b16 %v93
    %v238 = vunpack.c.l.b16 %v94
    %v239 = vunpack.c.l.b16 %v95
    %v240 = vunpack.c.l.b16 %v96
    %v241 = vunpack.c.l.b16 %v97
    %v242 = vunpack.c.l.b16 %v98
    %v243 = vunpack.c.l.b16 %v99
    %v244 = vunpack.c.l.b16 %v100
    %v245 = vunpack.c.l.b16 %v101
    %v246 = vunpack.c.l.b16 %v102
    %v247 = vunpack.c.l.b16 %v103
    %v248 = vunpack.c.l.b16 %v104
    %v249 = vunpack.c.l.b16 %v105
    %v250 = vunpack.c.l.b16 %v106
    %v251 = vunpack.c.l.b16 %v107
    %v252 = vunpack.c.l.b16 %v108
    %v253 = vunpack.c.l.b16 %v109
    %v254 = vunpack.c.l.b16 %v110
    %v255 = vpack.c.b16 %v192, %v191
    %v256 = vpack.c.b16 %v194, %v193
    %v257 = vpack.c.b16 %v196, %v195
    %v258 = vpack.c.b16 %v198, %v197
    %v259 = vpack.c.b16 %v200, %v199
    %v260 = vpack.c.b16 %v202, %v201
    %v261 = vpack.c.b16 %v204, %v203
    %v262 = vpack.c.b16 %v206, %v205
    %v263 = vpack.c.b16 %v208, %v207
    %v264 = vpack.c.b16 %v210, %v209
    %v265 = vpack.c.b16 %v212, %v211
    %v266 = vpack.c.b16 %v214, %v213
    %v267 = vpack.c.b16 %v216, %v215
    %v268 = vpack.c.b16 %v218, %v217
    %v269 = vpack.c.b16 %v220, %v219
    %v270 = vpack.c.b16 %v222, %v221
    %v271 = vpack.c.b16 %v224, %v223
    %v272 = vpack.c.b16 %v226, %v225
    %v273 = vpack.c.b16 %v228, %v227
    %v274 = vpack.c.b16 %v230, %v229
    %v275 = vpack.c.b16 %v232, %v231
    %v276 = vpack.c.b16 %v234, %v233
    %v277 = vpack.c.b16 %v236, %v235
    %v278 = vpack.c.b16 %v238, %v237
    %v279 = vpack.c.b16 %v240, %v239
    %v280 = vpack.c.b16 %v242, %v241
    %v281 = vpack.c.b16 %v244, %v243
    %v282 = vpack.c.b16 %v246, %v245
    %v283 = vpack.c.b16 %v248, %v247
    %v284 = vpack.c.b16 %v250, %v249
    %v285 = vpack.c.b16 %v252, %v251
    %v286 = vpack.c.b16 %v254, %v253
    %v335 = vunpack.c.l.b16 %v111
    %v336 = vunpack.c.l.b16 %v112
    %v337 = vunpack.c.l.b16 %v113
    %v338 = vunpack.c.l.b16 %v114
    %v339 = vunpack.c.l.b16 %v115
    %v340 = vunpack.c.l.b16 %v116
    %v341 = vunpack.c.l.b16 %v117
    %v342 = vunpack.c.l.b16 %v118
    %v343 = vunpack.c.l.b16 %v119
    %v344 = vunpack.c.l.b16 %v120
    %v345 = vunpack.c.l.b16 %v121
    %v346 = vunpack.c.l.b16 %v122
    %v347 = vunpack.c.l.b16 %v123
    %v348 = vunpack.c.l.b16 %v124
    %v349 = vunpack.c.l.b16 %v125
    %v350 = vunpack.c.l.b16 %v126
    %v351 = vpack.c.b16 %v336, %v335
    %v352 = vpack.c.b16 %v338, %v337
    %v353 = vpack.c.b16 %v340, %v339
    %v354 = vpack.c.b16 %v342, %v341
    %v355 = vpack.c.b16 %v344, %v343
    %v356 = vpack.c.b16 %v346, %v345
    %v357 = vpack.c.b16 %v348, %v347
    %v358 = vpack.c.b16 %v350, %v349
    %367 = vmatprep.subr.bf16.mxu0 0
    %368 = vmatpush1.bf16.msra.mxu0 %v351
    %369 = vmatprep.subr.bf16.mxu0 0
    %370 = vmatpush1.bf16.msra.mxu0 %v352
    %371 = vmatprep.subr.bf16.mxu0 0
    %372 = vmatpush1.bf16.msra.mxu0 %v353
    %373 = vmatprep.subr.bf16.mxu0 0
    %374 = vmatpush1.bf16.msra.mxu0 %v354
    %375 = vmatprep.subr.bf16.mxu0 0
    %376 = vmatpush1.bf16.msra.mxu0 %v355
    %377 = vmatprep.subr.bf16.mxu0 0
    %378 = vmatpush1.bf16.msra.mxu0 %v356
    %379 = vmatprep.subr.bf16.mxu0 0
    %380 = vmatpush1.bf16.msra.mxu0 %v357
    %381 = vmatprep.subr.bf16.mxu0 0
    %382 = vmatpush1.bf16.msra.mxu0 %v358
    %383 = vmatprep.subr.bf16.mxu0 0
    %384 = vmatpush1.bf16.msra.mxu0 0
    %385 = vmatprep.subr.bf16.mxu0 0
    %386 = vmatpush1.bf16.msra.mxu0 0
    %387 = vmatprep.subr.bf16.mxu0 0
    %388 = vmatpush1.bf16.msra.mxu0 0
    %389 = vmatprep.subr.bf16.mxu0 0
    %390 = vmatpush1.bf16.msra.mxu0 0
    %391 = vmatprep.subr.bf16.mxu0 0
    %392 = vmatpush1.bf16.msra.mxu0 0
    %393 = vmatprep.subr.bf16.mxu0 0
    %394 = vmatpush1.bf16.msra.mxu0 0
    %395 = vmatprep.subr.bf16.mxu0 0
    %396 = vmatpush1.bf16.msra.mxu0 0
    %397 = vmatprep.subr.bf16.mxu0 0
    %398 = vmatpush1.bf16.msra.mxu0 0
    %399 = vmatprep.mubr.bf16.mxu0 0
    %400 = vmatmul.mubr.bf16.gmra.mrb[0].mxu0 %v255
    %v401 = vpop.f32.mrb[0].mxu0
    %v402 = vadd.f32 0.0, %v401
    %v403 = vpop.f32.mrb[0].mxu0
    %v404 = vpop.f32.mrb[0].mxu0
    %v405 = vadd.f32 0.0, %v404
    %v406 = vpop.f32.mrb[0].mxu0
    %407 = vmatprep.mubr.bf16.mxu0 0
    %408 = vmatmul.mubr.bf16.gmra.mrb[0].mxu0 %v256
    %v409 = vpop.f32.mrb[0].mxu0
    %v410 = vadd.f32 0.0, %v409
    %v411 = vpop.f32.mrb[0].mxu0
    %v412 = vpop.f32.mrb[0].mxu0
    %v413 = vadd.f32 0.0, %v412
    %v414 = vpop.f32.mrb[0].mxu0
    %415 = vmatprep.mubr.bf16.mxu0 0
    %416 = vmatmul.mubr.bf16.gmra.mrb[0].mxu0 %v257
    %v417 = vpop.f32.mrb[0].mxu0
    %v418 = vadd.f32 0.0, %v417
    %v419 = vpop.f32.mrb[0].mxu0
    %v420 = vpop.f32.mrb[0].mxu0
    %v421 = vadd.f32 0.0, %v420
    %v422 = vpop.f32.mrb[0].mxu0
    %423 = vmatprep.mubr.bf16.mxu0 0
    %424 = vmatmul.mubr.bf16.gmra.mrb[0].mxu0 %v258
    %v425 = vpop.f32.mrb[0].mxu0
    %v426 = vadd.f32 0.0, %v425
    %v427 = vpop.f32.mrb[0].mxu0
    %v428 = vpop.f32.mrb[0].mxu0
    %v429 = vadd.f32 0.0, %v428
    %v430 = vpop.f32.mrb[0].mxu0
    %431 = vmatprep.mubr.bf16.mxu0 0
    %432 = vmatmul.mubr.bf16.gmra.mrb[0].mxu0 %v259
    %v433 = vpop.f32.mrb[0].mxu0
    %v434 = vadd.f32 0.0, %v433
    %v435 = vpop.f32.mrb[0].mxu0
    %v436 = vpop.f32.mrb[0].mxu0
    %v437 = vadd.f32 0.0, %v436
    %v438 = vpop.f32.mrb[0].mxu0
    %439 = vmatprep.mubr.bf16.mxu0 0
    %440 = vmatmul.mubr.bf16.gmra.mrb[0].mxu0 %v260
    %v441 = vpop.f32.mrb[0].mxu0
    %v442 = vadd.f32 0.0, %v441
    %v443 = vpop.f32.mrb[0].mxu0
    %v444 = vpop.f32.mrb[0].mxu0
    %v445 = vadd.f32 0.0, %v444
    %v446 = vpop.f32.mrb[0].mxu0
    %447 = vmatprep.mubr.bf16.mxu0 0
    %448 = vmatmul.mubr.bf16.gmra.mrb[0].mxu0 %v261
    %v449 = vpop.f32.mrb[0].mxu0
    %v450 = vadd.f32 0.0, %v449
    %v451 = vpop.f32.mrb[0].mxu0
    %v452 = vpop.f32.mrb[0].mxu0
    %v453 = vadd.f32 0.0, %v452
    %v454 = vpop.f32.mrb[0].mxu0
    %455 = vmatprep.mubr.bf16.mxu0 0
    %456 = vmatmul.mubr.bf16.gmra.mrb[0].mxu0 %v262
    %v457 = vpop.f32.mrb[0].mxu0
    %v458 = vadd.f32 0.0, %v457
    %v459 = vpop.f32.mrb[0].mxu0
    %v460 = vpop.f32.mrb[0].mxu0
    %v461 = vadd.f32 0.0, %v460
    %v462 = vpop.f32.mrb[0].mxu0
    %463 = vmatprep.mubr.bf16.mxu0 0
    %464 = vmatmul.mubr.bf16.gmra.mrb[0].mxu0 %v263
    %v465 = vpop.f32.mrb[0].mxu0
    %v466 = vadd.f32 0.0, %v465
    %v467 = vpop.f32.mrb[0].mxu0
    %v468 = vpop.f32.mrb[0].mxu0
    %v469 = vadd.f32 0.0, %v468
    %v470 = vpop.f32.mrb[0].mxu0
    %471 = vmatprep.mubr.bf16.mxu0 0
    %472 = vmatmul.mubr.bf16.gmra.mrb[0].mxu0 %v264
    %v473 = vpop.f32.mrb[0].mxu0
    %v474 = vadd.f32 0.0, %v473
    %v475 = vpop.f32.mrb[0].mxu0
    %v476 = vpop.f32.mrb[0].mxu0
    %v477 = vadd.f32 0.0, %v476
    %v478 = vpop.f32.mrb[0].mxu0
    %479 = vmatprep.mubr.bf16.mxu0 0
    %480 = vmatmul.mubr.bf16.gmra.mrb[0].mxu0 %v265
    %v481 = vpop.f32.mrb[0].mxu0
    %v482 = vadd.f32 0.0, %v481
    %v483 = vpop.f32.mrb[0].mxu0
    %v484 = vpop.f32.mrb[0].mxu0
    %v485 = vadd.f32 0.0, %v484
    %v486 = vpop.f32.mrb[0].mxu0
    %487 = vmatprep.mubr.bf16.mxu0 0
    %488 = vmatmul.mubr.bf16.gmra.mrb[0].mxu0 %v266
    %v489 = vpop.f32.mrb[0].mxu0
    %v490 = vadd.f32 0.0, %v489
    %v491 = vpop.f32.mrb[0].mxu0
    %v492 = vpop.f32.mrb[0].mxu0
    %v493 = vadd.f32 0.0, %v492
    %v494 = vpop.f32.mrb[0].mxu0
    %495 = vmatprep.mubr.bf16.mxu0 0
    %496 = vmatmul.mubr.bf16.gmra.mrb[0].mxu0 %v267
    %v497 = vpop.f32.mrb[0].mxu0
    %v498 = vadd.f32 0.0, %v497
    %v499 = vpop.f32.mrb[0].mxu0
    %v500 = vpop.f32.mrb[0].mxu0
    %v501 = vadd.f32 0.0, %v500
    %v502 = vpop.f32.mrb[0].mxu0
    %503 = vmatprep.mubr.bf16.mxu0 0
    %504 = vmatmul.mubr.bf16.gmra.mrb[0].mxu0 %v268
    %v505 = vpop.f32.mrb[0].mxu0
    %v506 = vadd.f32 0.0, %v505
    %v507 = vpop.f32.mrb[0].mxu0
    %v508 = vpop.f32.mrb[0].mxu0
    %v509 = vadd.f32 0.0, %v508
    %v510 = vpop.f32.mrb[0].mxu0
    %511 = vmatprep.mubr.bf16.mxu0 0
    %512 = vmatmul.mubr.bf16.gmra.mrb[0].mxu0 %v269
    %v513 = vpop.f32.mrb[0].mxu0
    %v514 = vadd.f32 0.0, %v513
    %v515 = vpop.f32.mrb[0].mxu0
    %v516 = vpop.f32.mrb[0].mxu0
    %v517 = vadd.f32 0.0, %v516
    %v518 = vpop.f32.mrb[0].mxu0
    %519 = vmatprep.mubr.bf16.mxu0 0
    %520 = vmatmul.mubr.bf16.gmra.mrb[0].mxu0 %v270
    %v521 = vpop.f32.mrb[0].mxu0
    %v522 = vadd.f32 0.0, %v521
    %v523 = vpop.f32.mrb[0].mxu0
    %v524 = vpop.f32.mrb[0].mxu0
    %v525 = vadd.f32 0.0, %v524
    %v526 = vpop.f32.mrb[0].mxu0
    %527 = vmatprep.mubr.bf16.mxu0 0
    %528 = vmatmul.mubr.bf16.gmra.mrb[0].mxu0 %v271
    %v529 = vpop.f32.mrb[0].mxu0
    %v530 = vadd.f32 0.0, %v529
    %v531 = vpop.f32.mrb[0].mxu0
    %v532 = vpop.f32.mrb[0].mxu0
    %v533 = vadd.f32 0.0, %v532
    %v534 = vpop.f32.mrb[0].mxu0
    %535 = vmatprep.mubr.bf16.mxu0 0
    %536 = vmatmul.mubr.bf16.gmra.mrb[0].mxu0 %v272
    %v537 = vpop.f32.mrb[0].mxu0
    %v538 = vadd.f32 0.0, %v537
    %v539 = vpop.f32.mrb[0].mxu0
    %v540 = vpop.f32.mrb[0].mxu0
    %v541 = vadd.f32 0.0, %v540
    %v542 = vpop.f32.mrb[0].mxu0
    %543 = vmatprep.mubr.bf16.mxu0 0
    %544 = vmatmul.mubr.bf16.gmra.mrb[0].mxu0 %v273
    %v545 = vpop.f32.mrb[0].mxu0
    %v546 = vadd.f32 0.0, %v545
    %v547 = vpop.f32.mrb[0].mxu0
    %v548 = vpop.f32.mrb[0].mxu0
    %v549 = vadd.f32 0.0, %v548
    %v550 = vpop.f32.mrb[0].mxu0
    %551 = vmatprep.mubr.bf16.mxu0 0
    %552 = vmatmul.mubr.bf16.gmra.mrb[0].mxu0 %v274
    %v553 = vpop.f32.mrb[0].mxu0
    %v554 = vadd.f32 0.0, %v553
    %v555 = vpop.f32.mrb[0].mxu0
    %v556 = vpop.f32.mrb[0].mxu0
    %v557 = vadd.f32 0.0, %v556
    %v558 = vpop.f32.mrb[0].mxu0
    %559 = vmatprep.mubr.bf16.mxu0 0
    %560 = vmatmul.mubr.bf16.gmra.mrb[0].mxu0 %v275
    %v561 = vpop.f32.mrb[0].mxu0
    %v562 = vadd.f32 0.0, %v561
    %v563 = vpop.f32.mrb[0].mxu0
    %v564 = vpop.f32.mrb[0].mxu0
    %v565 = vadd.f32 0.0, %v564
    %v566 = vpop.f32.mrb[0].mxu0
    %567 = vmatprep.mubr.bf16.mxu0 0
    %568 = vmatmul.mubr.bf16.gmra.mrb[0].mxu0 %v276
    %v569 = vpop.f32.mrb[0].mxu0
    %v570 = vadd.f32 0.0, %v569
    %v571 = vpop.f32.mrb[0].mxu0
    %v572 = vpop.f32.mrb[0].mxu0
    %v573 = vadd.f32 0.0, %v572
    %v574 = vpop.f32.mrb[0].mxu0
    %575 = vmatprep.mubr.bf16.mxu0 0
    %576 = vmatmul.mubr.bf16.gmra.mrb[0].mxu0 %v277
    %v577 = vpop.f32.mrb[0].mxu0
    %v578 = vadd.f32 0.0, %v577
    %v579 = vpop.f32.mrb[0].mxu0
    %v580 = vpop.f32.mrb[0].mxu0
    %v581 = vadd.f32 0.0, %v580
    %v582 = vpop.f32.mrb[0].mxu0
    %583 = vmatprep.mubr.bf16.mxu0 0
    %584 = vmatmul.mubr.bf16.gmra.mrb[0].mxu0 %v278
    %v585 = vpop.f32.mrb[0].mxu0
    %v586 = vadd.f32 0.0, %v585
    %v587 = vpop.f32.mrb[0].mxu0
    %v588 = vpop.f32.mrb[0].mxu0
    %v589 = vadd.f32 0.0, %v588
    %v590 = vpop.f32.mrb[0].mxu0
    %591 = vmatprep.mubr.bf16.mxu0 0
    %592 = vmatmul.mubr.bf16.gmra.mrb[0].mxu0 %v279
    %v593 = vpop.f32.mrb[0].mxu0
    %v594 = vadd.f32 0.0, %v593
    %v595 = vpop.f32.mrb[0].mxu0
    %v596 = vpop.f32.mrb[0].mxu0
    %v597 = vadd.f32 0.0, %v596
    %v598 = vpop.f32.mrb[0].mxu0
    %599 = vmatprep.mubr.bf16.mxu0 0
    %600 = vmatmul.mubr.bf16.gmra.mrb[0].mxu0 %v280
    %v601 = vpop.f32.mrb[0].mxu0
    %v602 = vadd.f32 0.0, %v601
    %v603 = vpop.f32.mrb[0].mxu0
    %v604 = vpop.f32.mrb[0].mxu0
    %v605 = vadd.f32 0.0, %v604
    %v606 = vpop.f32.mrb[0].mxu0
    %607 = vmatprep.mubr.bf16.mxu0 0
    %608 = vmatmul.mubr.bf16.gmra.mrb[0].mxu0 %v281
    %v609 = vpop.f32.mrb[0].mxu0
    %v610 = vadd.f32 0.0, %v609
    %v611 = vpop.f32.mrb[0].mxu0
    %v612 = vpop.f32.mrb[0].mxu0
    %v613 = vadd.f32 0.0, %v612
    %v614 = vpop.f32.mrb[0].mxu0
    %615 = vmatprep.mubr.bf16.mxu0 0
    %616 = vmatmul.mubr.bf16.gmra.mrb[0].mxu0 %v282
    %v617 = vpop.f32.mrb[0].mxu0
    %v618 = vadd.f32 0.0, %v617
    %v619 = vpop.f32.mrb[0].mxu0
    %v620 = vpop.f32.mrb[0].mxu0
    %v621 = vadd.f32 0.0, %v620
    %v622 = vpop.f32.mrb[0].mxu0
    %623 = vmatprep.mubr.bf16.mxu0 0
    %624 = vmatmul.mubr.bf16.gmra.mrb[0].mxu0 %v283
    %v625 = vpop.f32.mrb[0].mxu0
    %v626 = vadd.f32 0.0, %v625
    %v627 = vpop.f32.mrb[0].mxu0
    %v628 = vpop.f32.mrb[0].mxu0
    %v629 = vadd.f32 0.0, %v628
    %v630 = vpop.f32.mrb[0].mxu0
    %631 = vmatprep.mubr.bf16.mxu0 0
    %632 = vmatmul.mubr.bf16.gmra.mrb[0].mxu0 %v284
    %v633 = vpop.f32.mrb[0].mxu0
    %v634 = vadd.f32 0.0, %v633
    %v635 = vpop.f32.mrb[0].mxu0
    %v636 = vpop.f32.mrb[0].mxu0
    %v637 = vadd.f32 0.0, %v636
    %v638 = vpop.f32.mrb[0].mxu0
    %639 = vmatprep.mubr.bf16.mxu0 0
    %640 = vmatmul.mubr.bf16.gmra.mrb[0].mxu0 %v285
    %v641 = vpop.f32.mrb[0].mxu0
    %v642 = vadd.f32 0.0, %v641
    %v643 = vpop.f32.mrb[0].mxu0
    %v644 = vpop.f32.mrb[0].mxu0
    %v645 = vadd.f32 0.0, %v644
    %v646 = vpop.f32.mrb[0].mxu0
    %647 = vmatprep.mubr.bf16.mxu0 0
    %648 = vmatmul.mubr.bf16.gmra.mrb[0].mxu0 %v286
    %v649 = vpop.f32.mrb[0].mxu0
    %v650 = vadd.f32 0.0, %v649
    %v651 = vpop.f32.mrb[0].mxu0
    %v652 = vpop.f32.mrb[0].mxu0
    %v653 = vadd.f32 0.0, %v652
    %v654 = vpop.f32.mrb[0].mxu0
    %655 = vdwg.mxu0
    %v656 = vld [vmem:[%s2] sm:$0x1]
    %v658 = vlaneseq
    %v659 = vshrl.u32 %v658, 7
    %v660 = vsub.s32 0, %v659
    %v661 = vrot.slane %v656, %v660
    %v663 = vmul.f32 %v402, %v661
    %v664 = vmul.f32 %v405, %v661
    %v665 = vmul.f32 %v410, %v661
    %v666 = vmul.f32 %v413, %v661
    %v667 = vmul.f32 %v418, %v661
    %v668 = vmul.f32 %v421, %v661
    %v669 = vmul.f32 %v426, %v661
    %v670 = vmul.f32 %v429, %v661
    %v671 = vmul.f32 %v434, %v661
    %v672 = vmul.f32 %v437, %v661
    %v673 = vmul.f32 %v442, %v661
    %v674 = vmul.f32 %v445, %v661
    %v675 = vmul.f32 %v450, %v661
    %v676 = vmul.f32 %v453, %v661
    %v677 = vmul.f32 %v458, %v661
    %v678 = vmul.f32 %v461, %v661
    %v679 = vmul.f32 %v466, %v661
    %v680 = vmul.f32 %v469, %v661
    %v681 = vmul.f32 %v474, %v661
    %v682 = vmul.f32 %v477, %v661
    %v683 = vmul.f32 %v482, %v661
    %v684 = vmul.f32 %v485, %v661
    %v685 = vmul.f32 %v490, %v661
    %v686 = vmul.f32 %v493, %v661
    %v687 = vmul.f32 %v498, %v661
    %v688 = vmul.f32 %v501, %v661
    %v689 = vmul.f32 %v506, %v661
    %v690 = vmul.f32 %v509, %v661
    %v691 = vmul.f32 %v514, %v661
    %v692 = vmul.f32 %v517, %v661
    %v693 = vmul.f32 %v522, %v661
    %v694 = vmul.f32 %v525, %v661
    %v695 = vmul.f32 %v530, %v661
    %v696 = vmul.f32 %v533, %v661
    %v697 = vmul.f32 %v538, %v661
    %v698 = vmul.f32 %v541, %v661
    %v699 = vmul.f32 %v546, %v661
    %v700 = vmul.f32 %v549, %v661
    %v701 = vmul.f32 %v554, %v661
    %v702 = vmul.f32 %v557, %v661
    %v703 = vmul.f32 %v562, %v661
    %v704 = vmul.f32 %v565, %v661
    %v705 = vmul.f32 %v570, %v661
    %v706 = vmul.f32 %v573, %v661
    %v707 = vmul.f32 %v578, %v661
    %v708 = vmul.f32 %v581, %v661
    %v709 = vmul.f32 %v586, %v661
    %v710 = vmul.f32 %v589, %v661
    %v711 = vmul.f32 %v594, %v661
    %v712 = vmul.f32 %v597, %v661
    %v713 = vmul.f32 %v602, %v661
    %v714 = vmul.f32 %v605, %v661
    %v715 = vmul.f32 %v610, %v661
    %v716 = vmul.f32 %v613, %v661
    %v717 = vmul.f32 %v618, %v661
    %v718 = vmul.f32 %v621, %v661
    %v719 = vmul.f32 %v626, %v661
    %v720 = vmul.f32 %v629, %v661
    %v721 = vmul.f32 %v634, %v661
    %v722 = vmul.f32 %v637, %v661
    %v723 = vmul.f32 %v642, %v661
    %v724 = vmul.f32 %v645, %v661
    %v725 = vmul.f32 %v650, %v661
    %v726 = vmul.f32 %v653, %v661
    %v727 = vld [vmem:[%s3] sm:$0x1]
    %v729 = vlaneseq
    %v730 = vshrl.u32 %v729, 7
    %v731 = vsub.s32 0, %v730
    %v732 = vrot.slane %v727, %v731
    %v734 = vadd.f32 %v663, %v732
    %v735 = vadd.f32 %v664, %v732
    %v736 = vadd.f32 %v665, %v732
    %v737 = vadd.f32 %v666, %v732
    %v738 = vadd.f32 %v667, %v732
    %v739 = vadd.f32 %v668, %v732
    %v740 = vadd.f32 %v669, %v732
    %v741 = vadd.f32 %v670, %v732
    %v742 = vadd.f32 %v671, %v732
    %v743 = vadd.f32 %v672, %v732
    %v744 = vadd.f32 %v673, %v732
    %v745 = vadd.f32 %v674, %v732
    %v746 = vadd.f32 %v675, %v732
    %v747 = vadd.f32 %v676, %v732
    %v748 = vadd.f32 %v677, %v732
    %v749 = vadd.f32 %v678, %v732
    %v750 = vadd.f32 %v679, %v732
    %v751 = vadd.f32 %v680, %v732
    %v752 = vadd.f32 %v681, %v732
    %v753 = vadd.f32 %v682, %v732
    %v754 = vadd.f32 %v683, %v732
    %v755 = vadd.f32 %v684, %v732
    %v756 = vadd.f32 %v685, %v732
    %v757 = vadd.f32 %v686, %v732
    %v758 = vadd.f32 %v687, %v732
    %v759 = vadd.f32 %v688, %v732
    %v760 = vadd.f32 %v689, %v732
    %v761 = vadd.f32 %v690, %v732
    %v762 = vadd.f32 %v691, %v732
    %v763 = vadd.f32 %v692, %v732
    %v764 = vadd.f32 %v693, %v732
    %v765 = vadd.f32 %v694, %v732
    %v766 = vadd.f32 %v695, %v732
    %v767 = vadd.f32 %v696, %v732
    %v768 = vadd.f32 %v697, %v732
    %v769 = vadd.f32 %v698, %v732
    %v770 = vadd.f32 %v699, %v732
    %v771 = vadd.f32 %v700, %v732
    %v772 = vadd.f32 %v701, %v732
    %v773 = vadd.f32 %v702, %v732
    %v774 = vadd.f32 %v703, %v732
    %v775 = vadd.f32 %v704, %v732
    %v776 = vadd.f32 %v705, %v732
    %v777 = vadd.f32 %v706, %v732
    %v778 = vadd.f32 %v707, %v732
    %v779 = vadd.f32 %v708, %v732
    %v780 = vadd.f32 %v709, %v732
    %v781 = vadd.f32 %v710, %v732
    %v782 = vadd.f32 %v711, %v732
    %v783 = vadd.f32 %v712, %v732
    %v784 = vadd.f32 %v713, %v732
    %v785 = vadd.f32 %v714, %v732
    %v786 = vadd.f32 %v715, %v732
    %v787 = vadd.f32 %v716, %v732
    %v788 = vadd.f32 %v717, %v732
    %v789 = vadd.f32 %v718, %v732
    %v790 = vadd.f32 %v719, %v732
    %v791 = vadd.f32 %v720, %v732
    %v792 = vadd.f32 %v721, %v732
    %v793 = vadd.f32 %v722, %v732
    %v794 = vadd.f32 %v723, %v732
    %v795 = vadd.f32 %v724, %v732
    %v796 = vadd.f32 %v725, %v732
    %v797 = vadd.f32 %v726, %v732
    %v798 = vpack.c.bf16 %v735, %v734
    %v799 = vpack.c.bf16 %v737, %v736
    %v800 = vpack.c.bf16 %v739, %v738
    %v801 = vpack.c.bf16 %v741, %v740
    %v802 = vpack.c.bf16 %v743, %v742
    %v803 = vpack.c.bf16 %v745, %v744
    %v804 = vpack.c.bf16 %v747, %v746
    %v805 = vpack.c.bf16 %v749, %v748
    %v806 = vpack.c.bf16 %v751, %v750
    %v807 = vpack.c.bf16 %v753, %v752
    %v808 = vpack.c.bf16 %v755, %v754
    %v809 = vpack.c.bf16 %v757, %v756
    %v810 = vpack.c.bf16 %v759, %v758
    %v811 = vpack.c.bf16 %v761, %v760
    %v812 = vpack.c.bf16 %v763, %v762
    %v813 = vpack.c.bf16 %v765, %v764
    %v814 = vpack.c.bf16 %v767, %v766
    %v815 = vpack.c.bf16 %v769, %v768
    %v816 = vpack.c.bf16 %v771, %v770
    %v817 = vpack.c.bf16 %v773, %v772
    %v818 = vpack.c.bf16 %v775, %v774
    %v819 = vpack.c.bf16 %v777, %v776
    %v820 = vpack.c.bf16 %v779, %v778
    %v821 = vpack.c.bf16 %v781, %v780
    %v822 = vpack.c.bf16 %v783, %v782
    %v823 = vpack.c.bf16 %v785, %v784
    %v824 = vpack.c.bf16 %v787, %v786
    %v825 = vpack.c.bf16 %v789, %v788
    %v826 = vpack.c.bf16 %v791, %v790
    %v827 = vpack.c.bf16 %v793, %v792
    %v828 = vpack.c.bf16 %v795, %v794
    %v829 = vpack.c.bf16 %v797, %v796
    %v862 = vunpack.c.l.b16 %v798
    %v863 = vunpack.c.h.b16 %v798
    %v864 = vunpack.c.l.b16 %v799
    %v865 = vunpack.c.h.b16 %v799
    %v866 = vunpack.c.l.b16 %v800
    %v867 = vunpack.c.h.b16 %v800
    %v868 = vunpack.c.l.b16 %v801
    %v869 = vunpack.c.h.b16 %v801
    %v870 = vunpack.c.l.b16 %v802
    %v871 = vunpack.c.h.b16 %v802
    %v872 = vunpack.c.l.b16 %v803
    %v873 = vunpack.c.h.b16 %v803
    %v874 = vunpack.c.l.b16 %v804
    %v875 = vunpack.c.h.b16 %v804
    %v876 = vunpack.c.l.b16 %v805
    %v877 = vunpack.c.h.b16 %v805
    %v878 = vunpack.c.l.b16 %v806
    %v879 = vunpack.c.h.b16 %v806
    %v880 = vunpack.c.l.b16 %v807
    %v881 = vunpack.c.h.b16 %v807
    %v882 = vunpack.c.l.b16 %v808
    %v883 = vunpack.c.h.b16 %v808
    %v884 = vunpack.c.l.b16 %v809
    %v885 = vunpack.c.h.b16 %v809
    %v886 = vunpack.c.l.b16 %v810
    %v887 = vunpack.c.h.b16 %v810
    %v888 = vunpack.c.l.b16 %v811
    %v889 = vunpack.c.h.b16 %v811
    %v890 = vunpack.c.l.b16 %v812
    %v891 = vunpack.c.h.b16 %v812
    %v892 = vunpack.c.l.b16 %v813
    %v893 = vunpack.c.h.b16 %v813
    %v894 = vunpack.c.l.b16 %v814
    %v895 = vunpack.c.h.b16 %v814
    %v896 = vunpack.c.l.b16 %v815
    %v897 = vunpack.c.h.b16 %v815
    %v898 = vunpack.c.l.b16 %v816
    %v899 = vunpack.c.h.b16 %v816
    %v900 = vunpack.c.l.b16 %v817
    %v901 = vunpack.c.h.b16 %v817
    %v902 = vunpack.c.l.b16 %v818
    %v903 = vunpack.c.h.b16 %v818
    %v904 = vunpack.c.l.b16 %v819
    %v905 = vunpack.c.h.b16 %v819
    %v906 = vunpack.c.l.b16 %v820
    %v907 = vunpack.c.h.b16 %v820
    %v908 = vunpack.c.l.b16 %v821
    %v909 = vunpack.c.h.b16 %v821
    %v910 = vunpack.c.l.b16 %v822
    %v911 = vunpack.c.h.b16 %v822
    %v912 = vunpack.c.l.b16 %v823
    %v913 = vunpack.c.h.b16 %v823
    %v914 = vunpack.c.l.b16 %v824
    %v915 = vunpack.c.h.b16 %v824
    %v916 = vunpack.c.l.b16 %v825
    %v917 = vunpack.c.h.b16 %v825
    %v918 = vunpack.c.l.b16 %v826
    %v919 = vunpack.c.h.b16 %v826
    %v920 = vunpack.c.l.b16 %v827
    %v921 = vunpack.c.h.b16 %v827
    %v922 = vunpack.c.l.b16 %v828
    %v923 = vunpack.c.h.b16 %v828
    %v924 = vunpack.c.l.b16 %v829
    %v925 = vunpack.c.h.b16 %v829
    %v926 = vpack.c.b16 %v862, %v862
    %v927 = vpack.c.b16 %v863, %v863
    %v928 = vpack.c.b16 %v864, %v864
    %v929 = vpack.c.b16 %v865, %v865
    %v930 = vpack.c.b16 %v866, %v866
    %v931 = vpack.c.b16 %v867, %v867
    %v932 = vpack.c.b16 %v868, %v868
    %v933 = vpack.c.b16 %v869, %v869
    %v934 = vpack.c.b16 %v870, %v870
    %v935 = vpack.c.b16 %v871, %v871
    %v936 = vpack.c.b16 %v872, %v872
    %v937 = vpack.c.b16 %v873, %v873
    %v938 = vpack.c.b16 %v874, %v874
    %v939 = vpack.c.b16 %v875, %v875
    %v940 = vpack.c.b16 %v876, %v876
    %v941 = vpack.c.b16 %v877, %v877
    %v942 = vpack.c.b16 %v878, %v878
    %v943 = vpack.c.b16 %v879, %v879
    %v944 = vpack.c.b16 %v880, %v880
    %v945 = vpack.c.b16 %v881, %v881
    %v946 = vpack.c.b16 %v882, %v882
    %v947 = vpack.c.b16 %v883, %v883
    %v948 = vpack.c.b16 %v884, %v884
    %v949 = vpack.c.b16 %v885, %v885
    %v950 = vpack.c.b16 %v886, %v886
    %v951 = vpack.c.b16 %v887, %v887
    %v952 = vpack.c.b16 %v888, %v888
    %v953 = vpack.c.b16 %v889, %v889
    %v954 = vpack.c.b16 %v890, %v890
    %v955 = vpack.c.b16 %v891, %v891
    %v956 = vpack.c.b16 %v892, %v892
    %v957 = vpack.c.b16 %v893, %v893
    %v958 = vpack.c.b16 %v894, %v894
    %v959 = vpack.c.b16 %v895, %v895
    %v960 = vpack.c.b16 %v896, %v896
    %v961 = vpack.c.b16 %v897, %v897
    %v962 = vpack.c.b16 %v898, %v898
    %v963 = vpack.c.b16 %v899, %v899
    %v964 = vpack.c.b16 %v900, %v900
    %v965 = vpack.c.b16 %v901, %v901
    %v966 = vpack.c.b16 %v902, %v902
    %v967 = vpack.c.b16 %v903, %v903
    %v968 = vpack.c.b16 %v904, %v904
    %v969 = vpack.c.b16 %v905, %v905
    %v970 = vpack.c.b16 %v906, %v906
    %v971 = vpack.c.b16 %v907, %v907
    %v972 = vpack.c.b16 %v908, %v908
    %v973 = vpack.c.b16 %v909, %v909
    %v974 = vpack.c.b16 %v910, %v910
    %v975 = vpack.c.b16 %v911, %v911
    %v976 = vpack.c.b16 %v912, %v912
    %v977 = vpack.c.b16 %v913, %v913
    %v978 = vpack.c.b16 %v914, %v914
    %v979 = vpack.c.b16 %v915, %v915
    %v980 = vpack.c.b16 %v916, %v916
    %v981 = vpack.c.b16 %v917, %v917
    %v982 = vpack.c.b16 %v918, %v918
    %v983 = vpack.c.b16 %v919, %v919
    %v984 = vpack.c.b16 %v920, %v920
    %v985 = vpack.c.b16 %v921, %v921
    %v986 = vpack.c.b16 %v922, %v922
    %v987 = vpack.c.b16 %v923, %v923
    %v988 = vpack.c.b16 %v924, %v924
    %v989 = vpack.c.b16 %v925, %v925
    %1054 = vst [vmem:[#allocation7] sm:$0xf] %v926
    %1055 = vst [vmem:[#allocation7 + $0x4] sm:$0xf] %v927
    %1056 = vst [vmem:[#allocation7 + $0x8] sm:$0xf] %v928
    %1057 = vst [vmem:[#allocation7 + $0xc] sm:$0xf] %v929
    %1058 = vst [vmem:[#allocation7 + $0x10] sm:$0xf] %v930
    %1059 = vst [vmem:[#allocation7 + $0x14] sm:$0xf] %v931
    %1060 = vst [vmem:[#allocation7 + $0x18] sm:$0xf] %v932
    %1061 = vst [vmem:[#allocation7 + $0x1c] sm:$0xf] %v933
    %1062 = vst [vmem:[#allocation7 + $0x20] sm:$0xf] %v934
    %1063 = vst [vmem:[#allocation7 + $0x24] sm:$0xf] %v935
    %1064 = vst [vmem:[#allocation7 + $0x28] sm:$0xf] %v936
    %1065 = vst [vmem:[#allocation7 + $0x2c] sm:$0xf] %v937
    %1066 = vst [vmem:[#allocation7 + $0x30] sm:$0xf] %v938
    %1067 = vst [vmem:[#allocation7 + $0x34] sm:$0xf] %v939
    %1068 = vst [vmem:[#allocation7 + $0x38] sm:$0xf] %v940
    %1069 = vst [vmem:[#allocation7 + $0x3c] sm:$0xf] %v941
    %1070 = vst [vmem:[#allocation7 + $0x40] sm:$0xf] %v942
    %1071 = vst [vmem:[#allocation7 + $0x44] sm:$0xf] %v943
    %1072 = vst [vmem:[#allocation7 + $0x48] sm:$0xf] %v944
    %1073 = vst [vmem:[#allocation7 + $0x4c] sm:$0xf] %v945
    %1074 = vst [vmem:[#allocation7 + $0x50] sm:$0xf] %v946
    %1075 = vst [vmem:[#allocation7 + $0x54] sm:$0xf] %v947
    %1076 = vst [vmem:[#allocation7 + $0x58] sm:$0xf] %v948
    %1077 = vst [vmem:[#allocation7 + $0x5c] sm:$0xf] %v949
    %1078 = vst [vmem:[#allocation7 + $0x60] sm:$0xf] %v950
    %1079 = vst [vmem:[#allocation7 + $0x64] sm:$0xf] %v951
    %1080 = vst [vmem:[#allocation7 + $0x68] sm:$0xf] %v952
    %1081 = vst [vmem:[#allocation7 + $0x6c] sm:$0xf] %v953
    %1082 = vst [vmem:[#allocation7 + $0x70] sm:$0xf] %v954
    %1083 = vst [vmem:[#allocation7 + $0x74] sm:$0xf] %v955
    %1084 = vst [vmem:[#allocation7 + $0x78] sm:$0xf] %v956
    %1085 = vst [vmem:[#allocation7 + $0x7c] sm:$0xf] %v957
    %1086 = vst [vmem:[#allocation7 + $0x80] sm:$0xf] %v958
    %1087 = vst [vmem:[#allocation7 + $0x84] sm:$0xf] %v959
    %1088 = vst [vmem:[#allocation7 + $0x88] sm:$0xf] %v960
    %1089 = vst [vmem:[#allocation7 + $0x8c] sm:$0xf] %v961
    %1090 = vst [vmem:[#allocation7 + $0x90] sm:$0xf] %v962
    %1091 = vst [vmem:[#allocation7 + $0x94] sm:$0xf] %v963
    %1092 = vst [vmem:[#allocation7 + $0x98] sm:$0xf] %v964
    %1093 = vst [vmem:[#allocation7 + $0x9c] sm:$0xf] %v965
    %1094 = vst [vmem:[#allocation7 + $0xa0] sm:$0xf] %v966
    %1095 = vst [vmem:[#allocation7 + $0xa4] sm:$0xf] %v967
    %1096 = vst [vmem:[#allocation7 + $0xa8] sm:$0xf] %v968
    %1097 = vst [vmem:[#allocation7 + $0xac] sm:$0xf] %v969
    %1098 = vst [vmem:[#allocation7 + $0xb0] sm:$0xf] %v970
    %1099 = vst [vmem:[#allocation7 + $0xb4] sm:$0xf] %v971
    %1100 = vst [vmem:[#allocation7 + $0xb8] sm:$0xf] %v972
    %1101 = vst [vmem:[#allocation7 + $0xbc] sm:$0xf] %v973
    %1102 = vst [vmem:[#allocation7 + $0xc0] sm:$0xf] %v974
    %1103 = vst [vmem:[#allocation7 + $0xc4] sm:$0xf] %v975
    %1104 = vst [vmem:[#allocation7 + $0xc8] sm:$0xf] %v976
    %1105 = vst [vmem:[#allocation7 + $0xcc] sm:$0xf] %v977
    %1106 = vst [vmem:[#allocation7 + $0xd0] sm:$0xf] %v978
    %1107 = vst [vmem:[#allocation7 + $0xd4] sm:$0xf] %v979
    %1108 = vst [vmem:[#allocation7 + $0xd8] sm:$0xf] %v980
    %1109 = vst [vmem:[#allocation7 + $0xdc] sm:$0xf] %v981
    %1110 = vst [vmem:[#allocation7 + $0xe0] sm:$0xf] %v982
    %1111 = vst [vmem:[#allocation7 + $0xe4] sm:$0xf] %v983
    %1112 = vst [vmem:[#allocation7 + $0xe8] sm:$0xf] %v984
    %1113 = vst [vmem:[#allocation7 + $0xec] sm:$0xf] %v985
    %1114 = vst [vmem:[#allocation7 + $0xf0] sm:$0xf] %v986
    %1115 = vst [vmem:[#allocation7 + $0xf4] sm:$0xf] %v987
    %1116 = vst [vmem:[#allocation7 + $0xf8] sm:$0xf] %v988
    %1117 = vst [vmem:[#allocation7 + $0xfc] sm:$0xf] %v989
    // Predicated region
    $region26: #{tpu_custom_call.1} parent=1 // pred_check
      _
    $region27: #{tpu_custom_call.1} parent=1 // pred_check_branch
      %1119 = sbr.rel (0) target = $region29
    $region28: #{tpu_custom_call.1} parent=1 // pred_region
      %s1121 = ssub.s32 4096, 4096
      %1122 = vsyncadd [#allocation4], %s1121
      %s1123 = sshll.u32 [#allocation7], 4
      %s1124 = int_to_ptr.vmem [resolvable:$true] %s1123
      %1129 = dma.vmem_to_hbm [thread:$0]  %s1124, 4096, %s4, [#allocation4], 64, 64, 4
    $region29: #{tpu_custom_call.1} parent=1 // pred_fallthru
      _
    // Predicated region
    $region30: #{tpu_custom_call.1} parent=1 // pred_check
      _
    $region31: #{tpu_custom_call.1} parent=1 // pred_check_branch
      %1131 = sbr.rel (0) target = $region33
    $region32: #{tpu_custom_call.1} parent=1 // pred_region
      %1132 = dma.done [#allocation4], 4096
    $region33: #{tpu_custom_call.1} parent=1 // pred_fallthru
      _
    %1133 = vsyncpa [#allocation3], 1
    %1134 = vsyncpa [#allocation6], 1
    %1135 = vsyncpa [#allocation4], 1

</llo_original>
